<compile_context>
chip_gen: v7x
topology: tpu7x:2x2x1
jax: 0.10.0
libtpu: 0.0.40
codegen_flags: <defaults>
</compile_context>

<pallas_src>
import functools

import jax
import jax.numpy as jnp
from jax.experimental import pallas as pl
from jax.experimental.pallas import tpu as pltpu


def training_net_kernel(xt_ref, labels_ref, w1_ref, b1_ref, w2_ref, b2_ref,
                        loss_ref, argmax_ref):
    xt = xt_ref[...]            # (IN,  N)   f32, batch on lanes
    w1 = w1_ref[...]            # (HID, IN)  f32, torch Linear(IN->HID).weight
    b1 = b1_ref[...]            # (HID, 1)   f32
    w2 = w2_ref[...]            # (OUT, HID) f32, torch Linear(HID->OUT).weight
    b2 = b2_ref[...]            # (OUT, 1)   f32
    labels = labels_ref[...]    # (1, N)     int32

    in_f, n = xt.shape
    hid = w1.shape[0]
    out_c = w2.shape[0]

    # ---- Layer 1: h = sigmoid(W1 @ x^T + b1), pure VPU (K = IN = 2) ----
    # Bias is the accumulator's initial value (single hoisted broadcast).
    h = jnp.broadcast_to(b1, (hid, n))
    for k in range(in_f):                      # static unroll, K = 2
        h = h + w1[:, k:k + 1] * xt[k:k + 1, :]
    h = jax.nn.sigmoid(h)                      # (HID, N), EUP transcendental

    # ---- Layer 2: pred = W2 @ h + b2, pure VPU (K = HID = 10) ----
    pred = jnp.broadcast_to(b2, (out_c, n))
    for k in range(hid):                       # static unroll, K = 10
        pred = pred + w2[:, k:k + 1] * h[k:k + 1, :]
    # pred: (OUT, N) f32 — classes on sublanes, batch on lanes.

    # ---- Cross-entropy with integer labels, mean reduction ----
    m = jnp.max(pred, axis=0, keepdims=True)                          # (1, N)
    lse = m + jnp.log(jnp.sum(jnp.exp(pred - m), axis=0, keepdims=True))
    cls = jax.lax.broadcasted_iota(jnp.int32, (out_c, n), 0)          # class ids
    picked = jnp.sum(jnp.where(cls == labels, pred, 0.0),
                     axis=0, keepdims=True)                           # (1, N)
    per_example = lse - picked                                        # (1, N)
    # Scalar store to SMEM; 1/n folds to a compile-time constant.
    loss_ref[0, 0] = jnp.sum(per_example) * (1.0 / n)

    # ---- argmax over classes (first-occurrence tie-break), lane-dense ----
    idx = jnp.where(pred == m, cls, jnp.int32(out_c))
    argmax_ref[...] = jnp.min(idx, axis=0, keepdims=True).astype(jnp.int32)


@functools.partial(jax.jit, static_argnames=())
def training_net_forward(x, labels, w1, b1, w2, b2):
    """x: (N, IN) f32; labels: (N,) int;
    w1: (HID, IN), b1: (HID,), w2: (OUT, HID), b2: (OUT,)  (torch-native layout)."""
    n = x.shape[0]
    hid = w1.shape[0]
    out_c = w2.shape[0]

    vmem = pl.BlockSpec(memory_space=pltpu.MemorySpace.VMEM)
    smem = pl.BlockSpec(memory_space=pltpu.MemorySpace.SMEM)

    loss, argmax = pl.pallas_call(
        training_net_kernel,
        out_shape=(
            jax.ShapeDtypeStruct((1, 1), jnp.float32),   # loss (SMEM scalar)
            jax.ShapeDtypeStruct((1, n), jnp.int32),     # argmax (lane-dense)
        ),
        in_specs=[vmem] * 6,
        out_specs=(smem, vmem),
    )(
        x.T,                                             # (IN, N): batch on lanes
        labels.astype(jnp.int32).reshape(1, n),
        w1, b1.reshape(hid, 1),
        w2, b2.reshape(out_c, 1),
    )
    return loss[0, 0], argmax[0, :]


def reference_forward(x, labels, w1, b1, w2, b2):
    h = jax.nn.sigmoid(x @ w1.T + b1)
    pred = h @ w2.T + b2
    lse = jax.scipy.special.logsumexp(pred, axis=-1)
    picked = jnp.take_along_axis(pred, labels[:, None], axis=-1)[:, 0]
    return jnp.mean(lse - picked), jnp.argmax(pred, axis=-1)


if __name__ == "__main__":
    N, IN, HID, OUT = 8, 2, 10, 2
    key = jax.random.PRNGKey(0)
    kx, kl, k1, k2, k3, k4 = jax.random.split(key, 6)

    # deterministic synthetic inputs / parameters (no checkpoint loading)
    x = jax.random.normal(kx, (N, IN), dtype=jnp.float32)
    labels = jax.random.randint(kl, (N,), 0, OUT, dtype=jnp.int32)

    # parameters in native torch nn.Linear layout: weight (out, in), bias (out,)
    w1 = jax.random.normal(k1, (HID, IN), dtype=jnp.float32) * 0.5
    b1 = jax.random.normal(k2, (HID,), dtype=jnp.float32) * 0.1
    w2 = jax.random.normal(k3, (OUT, HID), dtype=jnp.float32) * 0.5
    b2 = jax.random.normal(k4, (OUT,), dtype=jnp.float32) * 0.1

    loss, argmax = training_net_forward(x, labels, w1, b1, w2, b2)
    jax.block_until_ready((loss, argmax))

    ref_loss, ref_argmax = reference_forward(x, labels, w1, b1, w2, b2)
    assert jnp.allclose(loss, ref_loss, atol=1e-5), (loss, ref_loss)
    assert jnp.array_equal(argmax, ref_argmax.astype(jnp.int32)), (argmax, ref_argmax)

    print("KERNEL_OK")
</pallas_src>

<mosaic_0001>
module attributes {stable_mosaic.version = 11 : i64} {
  func.func @training_net_kernel(%arg0: memref<2x8xf32, #tpu.memory_space<vmem>>, %arg1: memref<1x8xi32, #tpu.memory_space<vmem>>, %arg2: memref<10x2xf32, #tpu.memory_space<vmem>>, %arg3: memref<10x1xf32, #tpu.memory_space<vmem>>, %arg4: memref<2x10xf32, #tpu.memory_space<vmem>>, %arg5: memref<2x1xf32, #tpu.memory_space<vmem>>, %arg6: memref<1x1xf32, #tpu.memory_space<smem>>, %arg7: memref<1x8xi32, #tpu.memory_space<vmem>>) attributes {dimension_semantics = [], scalar_prefetch = 0 : i64, scratch_operands = 0 : i64, tpu.core_type = #tpu.core_type<tc>} {
    %c0 = arith.constant 0 : index
    %c0_0 = arith.constant 0 : index
    %0 = vector.load %arg0[%c0, %c0_0] : memref<2x8xf32, #tpu.memory_space<vmem>>, vector<2x8xf32>
    %c0_1 = arith.constant 0 : index
    %c0_2 = arith.constant 0 : index
    %1 = vector.load %arg2[%c0_1, %c0_2] : memref<10x2xf32, #tpu.memory_space<vmem>>, vector<10x2xf32>
    %c0_3 = arith.constant 0 : index
    %c0_4 = arith.constant 0 : index
    %2 = vector.load %arg3[%c0_3, %c0_4] : memref<10x1xf32, #tpu.memory_space<vmem>>, vector<10x1xf32>
    %c0_5 = arith.constant 0 : index
    %c0_6 = arith.constant 0 : index
    %3 = vector.load %arg4[%c0_5, %c0_6] : memref<2x10xf32, #tpu.memory_space<vmem>>, vector<2x10xf32>
    %c0_7 = arith.constant 0 : index
    %c0_8 = arith.constant 0 : index
    %4 = vector.load %arg5[%c0_7, %c0_8] : memref<2x1xf32, #tpu.memory_space<vmem>>, vector<2x1xf32>
    %c0_9 = arith.constant 0 : index
    %c0_10 = arith.constant 0 : index
    %5 = vector.load %arg1[%c0_9, %c0_10] : memref<1x8xi32, #tpu.memory_space<vmem>>, vector<1x8xi32>
    %6 = vector.shape_cast %2 : vector<10x1xf32> to vector<10x1xf32>
    %7 = vector.broadcast %6 : vector<10x1xf32> to vector<10x8xf32>
    %8 = vector.extract_strided_slice %1 {offsets = [0, 0], sizes = [10, 1], strides = [1, 1]} : vector<10x2xf32> to vector<10x1xf32>
    %9 = vector.extract_strided_slice %0 {offsets = [0, 0], sizes = [1, 8], strides = [1, 1]} : vector<2x8xf32> to vector<1x8xf32>
    %10 = vector.broadcast %8 : vector<10x1xf32> to vector<10x8xf32>
    %11 = vector.broadcast %9 : vector<1x8xf32> to vector<10x8xf32>
    %12 = arith.mulf %10, %11 : vector<10x8xf32>
    %13 = arith.addf %7, %12 : vector<10x8xf32>
    %14 = vector.extract_strided_slice %1 {offsets = [0, 1], sizes = [10, 1], strides = [1, 1]} : vector<10x2xf32> to vector<10x1xf32>
    %15 = vector.extract_strided_slice %0 {offsets = [1, 0], sizes = [1, 8], strides = [1, 1]} : vector<2x8xf32> to vector<1x8xf32>
    %16 = vector.broadcast %14 : vector<10x1xf32> to vector<10x8xf32>
    %17 = vector.broadcast %15 : vector<1x8xf32> to vector<10x8xf32>
    %18 = arith.mulf %16, %17 : vector<10x8xf32>
    %19 = arith.addf %13, %18 : vector<10x8xf32>
    %20 = arith.negf %19 : vector<10x8xf32>
    %21 = math.exp %20 : vector<10x8xf32>
    %cst = arith.constant 1.000000e+00 : f32
    %22 = vector.broadcast %cst : f32 to vector<10x8xf32>
    %23 = arith.addf %22, %21 : vector<10x8xf32>
    %24 = arith.divf %22, %23 : vector<10x8xf32>
    %25 = vector.shape_cast %4 : vector<2x1xf32> to vector<2x1xf32>
    %26 = vector.broadcast %25 : vector<2x1xf32> to vector<2x8xf32>
    %27 = vector.extract_strided_slice %3 {offsets = [0, 0], sizes = [2, 1], strides = [1, 1]} : vector<2x10xf32> to vector<2x1xf32>
    %28 = vector.extract_strided_slice %24 {offsets = [0, 0], sizes = [1, 8], strides = [1, 1]} : vector<10x8xf32> to vector<1x8xf32>
    %29 = vector.broadcast %27 : vector<2x1xf32> to vector<2x8xf32>
    %30 = vector.broadcast %28 : vector<1x8xf32> to vector<2x8xf32>
    %31 = arith.mulf %29, %30 : vector<2x8xf32>
    %32 = arith.addf %26, %31 : vector<2x8xf32>
    %33 = vector.extract_strided_slice %3 {offsets = [0, 1], sizes = [2, 1], strides = [1, 1]} : vector<2x10xf32> to vector<2x1xf32>
    %34 = vector.extract_strided_slice %24 {offsets = [1, 0], sizes = [1, 8], strides = [1, 1]} : vector<10x8xf32> to vector<1x8xf32>
    %35 = vector.broadcast %33 : vector<2x1xf32> to vector<2x8xf32>
    %36 = vector.broadcast %34 : vector<1x8xf32> to vector<2x8xf32>
    %37 = arith.mulf %35, %36 : vector<2x8xf32>
    %38 = arith.addf %32, %37 : vector<2x8xf32>
    %39 = vector.extract_strided_slice %3 {offsets = [0, 2], sizes = [2, 1], strides = [1, 1]} : vector<2x10xf32> to vector<2x1xf32>
    %40 = vector.extract_strided_slice %24 {offsets = [2, 0], sizes = [1, 8], strides = [1, 1]} : vector<10x8xf32> to vector<1x8xf32>
    %41 = vector.broadcast %39 : vector<2x1xf32> to vector<2x8xf32>
    %42 = vector.broadcast %40 : vector<1x8xf32> to vector<2x8xf32>
    %43 = arith.mulf %41, %42 : vector<2x8xf32>
    %44 = arith.addf %38, %43 : vector<2x8xf32>
    %45 = vector.extract_strided_slice %3 {offsets = [0, 3], sizes = [2, 1], strides = [1, 1]} : vector<2x10xf32> to vector<2x1xf32>
    %46 = vector.extract_strided_slice %24 {offsets = [3, 0], sizes = [1, 8], strides = [1, 1]} : vector<10x8xf32> to vector<1x8xf32>
    %47 = vector.broadcast %45 : vector<2x1xf32> to vector<2x8xf32>
    %48 = vector.broadcast %46 : vector<1x8xf32> to vector<2x8xf32>
    %49 = arith.mulf %47, %48 : vector<2x8xf32>
    %50 = arith.addf %44, %49 : vector<2x8xf32>
    %51 = vector.extract_strided_slice %3 {offsets = [0, 4], sizes = [2, 1], strides = [1, 1]} : vector<2x10xf32> to vector<2x1xf32>
    %52 = vector.extract_strided_slice %24 {offsets = [4, 0], sizes = [1, 8], strides = [1, 1]} : vector<10x8xf32> to vector<1x8xf32>
    %53 = vector.broadcast %51 : vector<2x1xf32> to vector<2x8xf32>
    %54 = vector.broadcast %52 : vector<1x8xf32> to vector<2x8xf32>
    %55 = arith.mulf %53, %54 : vector<2x8xf32>
    %56 = arith.addf %50, %55 : vector<2x8xf32>
    %57 = vector.extract_strided_slice %3 {offsets = [0, 5], sizes = [2, 1], strides = [1, 1]} : vector<2x10xf32> to vector<2x1xf32>
    %58 = vector.extract_strided_slice %24 {offsets = [5, 0], sizes = [1, 8], strides = [1, 1]} : vector<10x8xf32> to vector<1x8xf32>
    %59 = vector.broadcast %57 : vector<2x1xf32> to vector<2x8xf32>
    %60 = vector.broadcast %58 : vector<1x8xf32> to vector<2x8xf32>
    %61 = arith.mulf %59, %60 : vector<2x8xf32>
    %62 = arith.addf %56, %61 : vector<2x8xf32>
    %63 = vector.extract_strided_slice %3 {offsets = [0, 6], sizes = [2, 1], strides = [1, 1]} : vector<2x10xf32> to vector<2x1xf32>
    %64 = vector.extract_strided_slice %24 {offsets = [6, 0], sizes = [1, 8], strides = [1, 1]} : vector<10x8xf32> to vector<1x8xf32>
    %65 = vector.broadcast %63 : vector<2x1xf32> to vector<2x8xf32>
    %66 = vector.broadcast %64 : vector<1x8xf32> to vector<2x8xf32>
    %67 = arith.mulf %65, %66 : vector<2x8xf32>
    %68 = arith.addf %62, %67 : vector<2x8xf32>
    %69 = vector.extract_strided_slice %3 {offsets = [0, 7], sizes = [2, 1], strides = [1, 1]} : vector<2x10xf32> to vector<2x1xf32>
    %70 = vector.extract_strided_slice %24 {offsets = [7, 0], sizes = [1, 8], strides = [1, 1]} : vector<10x8xf32> to vector<1x8xf32>
    %71 = vector.broadcast %69 : vector<2x1xf32> to vector<2x8xf32>
    %72 = vector.broadcast %70 : vector<1x8xf32> to vector<2x8xf32>
    %73 = arith.mulf %71, %72 : vector<2x8xf32>
    %74 = arith.addf %68, %73 : vector<2x8xf32>
    %75 = vector.extract_strided_slice %3 {offsets = [0, 8], sizes = [2, 1], strides = [1, 1]} : vector<2x10xf32> to vector<2x1xf32>
    %76 = vector.extract_strided_slice %24 {offsets = [8, 0], sizes = [1, 8], strides = [1, 1]} : vector<10x8xf32> to vector<1x8xf32>
    %77 = vector.broadcast %75 : vector<2x1xf32> to vector<2x8xf32>
    %78 = vector.broadcast %76 : vector<1x8xf32> to vector<2x8xf32>
    %79 = arith.mulf %77, %78 : vector<2x8xf32>
    %80 = arith.addf %74, %79 : vector<2x8xf32>
    %81 = vector.extract_strided_slice %3 {offsets = [0, 9], sizes = [2, 1], strides = [1, 1]} : vector<2x10xf32> to vector<2x1xf32>
    %82 = vector.extract_strided_slice %24 {offsets = [9, 0], sizes = [1, 8], strides = [1, 1]} : vector<10x8xf32> to vector<1x8xf32>
    %83 = vector.broadcast %81 : vector<2x1xf32> to vector<2x8xf32>
    %84 = vector.broadcast %82 : vector<1x8xf32> to vector<2x8xf32>
    %85 = arith.mulf %83, %84 : vector<2x8xf32>
    %86 = arith.addf %80, %85 : vector<2x8xf32>
    %cst_11 = arith.constant dense<0xFF800000> : vector<8xf32>
    %87 = vector.multi_reduction <maximumf>, %86, %cst_11 [0] : vector<2x8xf32> to vector<8xf32>
    %88 = vector.shape_cast %87 : vector<8xf32> to vector<1x8xf32>
    %89 = vector.broadcast %88 : vector<1x8xf32> to vector<2x8xf32>
    %90 = arith.subf %86, %89 : vector<2x8xf32>
    %91 = math.exp %90 : vector<2x8xf32>
    %cst_12 = arith.constant dense<0.000000e+00> : vector<8xf32>
    %92 = vector.multi_reduction <add>, %91, %cst_12 [0] : vector<2x8xf32> to vector<8xf32>
    %93 = vector.shape_cast %92 : vector<8xf32> to vector<1x8xf32>
    %94 = math.log %93 : vector<1x8xf32>
    %95 = arith.addf %88, %94 : vector<1x8xf32>
    %96 = tpu.iota {dimensions = array<i32: 0>} : vector<2x8xi32>
    %97 = vector.broadcast %5 : vector<1x8xi32> to vector<2x8xi32>
    %98 = arith.cmpi eq, %96, %97 : vector<2x8xi32>
    %cst_13 = arith.constant 0.000000e+00 : f32
    %99 = vector.broadcast %cst_13 : f32 to vector<2x8xf32>
    %100 = arith.select %98, %86, %99 : vector<2x8xi1>, vector<2x8xf32>
    %cst_14 = arith.constant dense<0.000000e+00> : vector<8xf32>
    %101 = vector.multi_reduction <add>, %100, %cst_14 [0] : vector<2x8xf32> to vector<8xf32>
    %102 = vector.shape_cast %101 : vector<8xf32> to vector<1x8xf32>
    %103 = arith.subf %95, %102 : vector<1x8xf32>
    %104 = vector.shape_cast %103 : vector<1x8xf32> to vector<1x1x8xf32>
    %cst_15 = arith.constant dense<0.000000e+00> : vector<1xf32>
    %105 = vector.multi_reduction <add>, %104, %cst_15 [1, 2] : vector<1x1x8xf32> to vector<1xf32>
    %106 = vector.shape_cast %105 : vector<1xf32> to vector<1x1x1xf32>
    %107 = vector.extract %106[0, 0, 0] : f32 from vector<1x1x1xf32>
    %cst_16 = arith.constant 1.250000e-01 : f32
    %108 = arith.mulf %107, %cst_16 : f32
    %c0_17 = arith.constant 0 : index
    %c0_18 = arith.constant 0 : index
    %109 = memref.load %arg6[%c0_17, %c0_18] : memref<1x1xf32, #tpu.memory_space<smem>>
    memref.store %108, %arg6[%c0_17, %c0_18] : memref<1x1xf32, #tpu.memory_space<smem>>
    %110 = vector.broadcast %88 : vector<1x8xf32> to vector<2x8xf32>
    %111 = arith.cmpf oeq, %86, %110 : vector<2x8xf32>
    %c2_i32 = arith.constant 2 : i32
    %112 = vector.broadcast %c2_i32 : i32 to vector<2x8xi32>
    %113 = arith.select %111, %96, %112 : vector<2x8xi1>, vector<2x8xi32>
    %cst_19 = arith.constant dense<2147483647> : vector<8xi32>
    %114 = vector.multi_reduction <minsi>, %113, %cst_19 [0] : vector<2x8xi32> to vector<8xi32>
    %115 = vector.shape_cast %114 : vector<8xi32> to vector<1x8xi32>
    %c0_20 = arith.constant 0 : index
    %c0_21 = arith.constant 0 : index
    %116 = vector.load %arg7[%c0_20, %c0_21] : memref<1x8xi32, #tpu.memory_space<vmem>>, vector<1x8xi32>
    tpu.vector_store %arg7[%c0_20, %c0_21], %115 {strides = array<i32>} : memref<1x8xi32, #tpu.memory_space<vmem>>, vector<1x8xi32>,
    return
  }
}

</mosaic_0001>

<llo_original>
// kernel: training_net_forward.1
$region0: #{training_net_forward.1}
  #allocation0 [shape = 'u32[]', space=smem, size = 0x4, offset = 0x4, fixed_abs, tag = 'smem constant byte address 0x4 - core index']
  #allocation1 [shape = 'u32[144,128]{1,0:T(1,128)}', space=vmem, size = 0x12000, scoped, tag = 'internal scratch']
  %s0 = inlined_call_operand.vmem [shape: f32[2,8], index: 0, kind: input, shape index: {}]
  %s1 = inlined_call_operand.vmem [shape: s32[1,8], index: 1, kind: input, shape index: {}]
  %s2 = inlined_call_operand.vmem [shape: f32[10,2], index: 2, kind: input, shape index: {}]
  %s3 = inlined_call_operand.vmem [shape: f32[10,1], index: 3, kind: input, shape index: {}]
  %s4 = inlined_call_operand.vmem [shape: f32[2,10], index: 4, kind: input, shape index: {}]
  %s5 = inlined_call_operand.vmem [shape: f32[2,1], index: 5, kind: input, shape index: {}]
  %s6 = inlined_call_operand.hbm [shape: f32[1,1], index: 6, kind: output, shape index: {0}]
  %s7 = inlined_call_operand.hbm [shape: s32[1,8], index: 7, kind: output, shape index: {1}]
  %8 = xla_tuple %s6, %s7
  %s9 = sld [smem:[#allocation0]]
  $region42: #{training_net_forward.1} parent=0
    _
  %s11 = ssub.s32 1, %s9
  %s12 = scalar_select 0, %s11, %s9
  $region1: #{training_net_forward.1} parent=0
    #allocation2 [shape = 'u8[512]{0}', space=smem, size = 0x200, scoped, tag = 'output window, operand 0, single buffered']
    #allocation3 [shape = 's32[1]{0}', space=sflag, size = 0x4, scoped, tag = 'scoped memory for training_net_forward.1']
    #allocation4 [shape = 's32[1]{0}', space=sflag, size = 0x4, scoped, tag = 'scoped memory for training_net_forward.1']
    #allocation5 [shape = 'u8[512]{0}', space=vmem, size = 0x400, scoped, tag = 'output window, operand 1, single buffered']
    %13 = vsyncpa [#allocation4], 0
    %14 = vsyncpa [#allocation3], 0
    // Predicated region
    $region2: #{training_net_forward.1} parent=1 // pred_check
      _
    $region3: #{training_net_forward.1} parent=1 // pred_check_branch
      %16 = sbr.rel (0) target = $region5
    $region4: #{training_net_forward.1} parent=1 // pred_region
      _
    $region5: #{training_net_forward.1} parent=1 // pred_fallthru
      _
    // Predicated region
    $region6: #{training_net_forward.1} parent=1 // pred_check
      _
    $region7: #{training_net_forward.1} parent=1 // pred_check_branch
      %18 = sbr.rel (0) target = $region9
    $region8: #{training_net_forward.1} parent=1 // pred_region
      _
    $region9: #{training_net_forward.1} parent=1 // pred_fallthru
      _
    // Predicated region
    $region10: #{training_net_forward.1} parent=1 // pred_check
      _
    $region11: #{training_net_forward.1} parent=1 // pred_check_branch
      %20 = sbr.rel (0) target = $region13
    $region12: #{training_net_forward.1} parent=1 // pred_region
      _
    $region13: #{training_net_forward.1} parent=1 // pred_fallthru
      _
    // Predicated region
    $region14: #{training_net_forward.1} parent=1 // pred_check
      _
    $region15: #{training_net_forward.1} parent=1 // pred_check_branch
      %22 = sbr.rel (0) target = $region17
    $region16: #{training_net_forward.1} parent=1 // pred_region
      _
    $region17: #{training_net_forward.1} parent=1 // pred_fallthru
      _
    // Predicated region
    $region18: #{training_net_forward.1} parent=1 // pred_check
      _
    $region19: #{training_net_forward.1} parent=1 // pred_check_branch
      %24 = sbr.rel (0) target = $region21
    $region20: #{training_net_forward.1} parent=1 // pred_region
      _
    $region21: #{training_net_forward.1} parent=1 // pred_fallthru
      _
    // Predicated region
    $region22: #{training_net_forward.1} parent=1 // pred_check
      _
    $region23: #{training_net_forward.1} parent=1 // pred_check_branch
      %26 = sbr.rel (0) target = $region25
    $region24: #{training_net_forward.1} parent=1 // pred_region
      _
    $region25: #{training_net_forward.1} parent=1 // pred_fallthru
      _
    %v27 = vld [vmem:[%s0] sm:$0x3]
    %v28 = vld [vmem:[%s2] sm:$0xff]
    %v29 = vld [vmem:[%s2 + $0x8] sm:$0x3]
    %v30 = vld [vmem:[%s3] sm:$0xff]
    %v31 = vld [vmem:[%s3 + $0x8] sm:$0x3]
    %v32 = vld [vmem:[%s4] sm:$0x3]
    %v33 = vld [vmem:[%s5] sm:$0x3]
    %v34 = vld [vmem:[%s1] sm:$0x1]
    %36 = vset.pattern.permute.xlu0 0
    %37 = vperm.xlu0 %36, %v30
    %v38 = vpop.permute.xlu0 %37
    %41 = vset.pattern.permute.xlu0 0
    %42 = vperm.xlu0 %41, %v31
    %v43 = vpop.permute.xlu0 %42
    %46 = vset.pattern.permute.xlu0 0
    %47 = vperm.xlu0 %46, %v28
    %v48 = vpop.permute.xlu0 %47
    %51 = vset.pattern.permute.xlu0 0
    %52 = vperm.xlu0 %51, %v29
    %v53 = vpop.permute.xlu0 %52
    %v55 = vlaneseq
    %v56 = vshrl.u32 %v55, 7
    %v57 = vsub.s32 0, %v56
    %v58 = vrot.slane %v27, %v57
    %v59 = vmul.f32 %v48, %v58
    %v60 = vmul.f32 %v53, %v58
    %v61 = vadd.f32 %v38, %v59
    %v62 = vadd.f32 %v43, %v60
    %63 = vset.pattern.permute.xlu0 1
    %64 = vperm.xlu0 %63, %v28
    %v65 = vpop.permute.xlu0 %64
    %67 = vset.pattern.permute.xlu0 1
    %68 = vperm.xlu0 %67, %v29
    %v69 = vpop.permute.xlu0 %68
    %v71 = vlaneseq
    %v72 = vshrl.u32 %v71, 7
    %v73 = vsub.s32 1, %v72
    %v74 = vrot.slane %v27, %v73
    %v75 = vmul.f32 %v65, %v74
    %v76 = vmul.f32 %v69, %v74
    %v77 = vadd.f32 %v61, %v75
    %v78 = vadd.f32 %v62, %v76
    %v79 = vxor.u32 %v77, 2147483648
    %v80 = vxor.u32 %v78, 2147483648
    %v81 = vmul.f32 %v79, 1.442695
    %v82 = vpow.pop %v81
    %v83 = vmul.f32 %v80, 1.442695
    %v84 = vpow.pop %v83
    %v85 = vadd.f32 %v82, 1.0
    %v86 = vadd.f32 %v84, 1.0
    %v87 = vrcp.pop %v85
    %v88 = vmul.f32 1.0, %v87
    %v89 = vrcp.pop %v86
    %v90 = vmul.f32 1.0, %v89
    %92 = vset.pattern.permute.xlu0 0
    %93 = vperm.xlu0 %92, %v33
    %v94 = vpop.permute.xlu0 %93
    %97 = vset.pattern.permute.xlu0 0
    %98 = vperm.xlu0 %97, %v32
    %v99 = vpop.permute.xlu0 %98
    %v101 = vlaneseq
    %v102 = vshrl.u32 %v101, 7
    %v103 = vsub.s32 0, %v102
    %v104 = vrot.slane %v88, %v103
    %v105 = vmul.f32 %v99, %v104
    %v106 = vadd.f32 %v94, %v105
    %107 = vset.pattern.permute.xlu0 1
    %108 = vperm.xlu0 %107, %v32
    %v109 = vpop.permute.xlu0 %108
    %v111 = vlaneseq
    %v112 = vshrl.u32 %v111, 7
    %v113 = vsub.s32 1, %v112
    %v114 = vrot.slane %v88, %v113
    %v115 = vmul.f32 %v109, %v114
    %v116 = vadd.f32 %v106, %v115
    %117 = vset.pattern.permute.xlu0 2
    %118 = vperm.xlu0 %117, %v32
    %v119 = vpop.permute.xlu0 %118
    %v121 = vlaneseq
    %v122 = vshrl.u32 %v121, 7
    %v123 = vsub.s32 2, %v122
    %v124 = vrot.slane %v88, %v123
    %v125 = vmul.f32 %v119, %v124
    %v126 = vadd.f32 %v116, %v125
    %127 = vset.pattern.permute.xlu0 3
    %128 = vperm.xlu0 %127, %v32
    %v129 = vpop.permute.xlu0 %128
    %v131 = vlaneseq
    %v132 = vshrl.u32 %v131, 7
    %v133 = vsub.s32 3, %v132
    %v134 = vrot.slane %v88, %v133
    %v135 = vmul.f32 %v129, %v134
    %v136 = vadd.f32 %v126, %v135
    %137 = vset.pattern.permute.xlu0 4
    %138 = vperm.xlu0 %137, %v32
    %v139 = vpop.permute.xlu0 %138
    %v141 = vlaneseq
    %v142 = vshrl.u32 %v141, 7
    %v143 = vsub.s32 4, %v142
    %v144 = vrot.slane %v88, %v143
    %v145 = vmul.f32 %v139, %v144
    %v146 = vadd.f32 %v136, %v145
    %147 = vset.pattern.permute.xlu0 5
    %148 = vperm.xlu0 %147, %v32
    %v149 = vpop.permute.xlu0 %148
    %v151 = vlaneseq
    %v152 = vshrl.u32 %v151, 7
    %v153 = vsub.s32 5, %v152
    %v154 = vrot.slane %v88, %v153
    %v155 = vmul.f32 %v149, %v154
    %v156 = vadd.f32 %v146, %v155
    %157 = vset.pattern.permute.xlu0 6
    %158 = vperm.xlu0 %157, %v32
    %v159 = vpop.permute.xlu0 %158
    %v161 = vlaneseq
    %v162 = vshrl.u32 %v161, 7
    %v163 = vsub.s32 6, %v162
    %v164 = vrot.slane %v88, %v163
    %v165 = vmul.f32 %v159, %v164
    %v166 = vadd.f32 %v156, %v165
    %167 = vset.pattern.permute.xlu0 7
    %168 = vperm.xlu0 %167, %v32
    %v169 = vpop.permute.xlu0 %168
    %v171 = vlaneseq
    %v172 = vshrl.u32 %v171, 7
    %v173 = vsub.s32 7, %v172
    %v174 = vrot.slane %v88, %v173
    %v175 = vmul.f32 %v169, %v174
    %v176 = vadd.f32 %v166, %v175
    %177 = vset.pattern.permute.xlu0 8
    %178 = vperm.xlu0 %177, %v32
    %v179 = vpop.permute.xlu0 %178
    %v181 = vlaneseq
    %v182 = vshrl.u32 %v181, 7
    %v183 = vsub.s32 0, %v182
    %v184 = vrot.slane %v90, %v183
    %v185 = vmul.f32 %v179, %v184
    %v186 = vadd.f32 %v176, %v185
    %187 = vset.pattern.permute.xlu0 9
    %188 = vperm.xlu0 %187, %v32
    %v189 = vpop.permute.xlu0 %188
    %v191 = vlaneseq
    %v192 = vshrl.u32 %v191, 7
    %v193 = vsub.s32 1, %v192
    %v194 = vrot.slane %v90, %v193
    %v195 = vmul.f32 %v189, %v194
    %v196 = vadd.f32 %v186, %v195
    %vm197 = vcmask 58368
    %v198 = vsel %vm197, %v196, -inf
    %v199 = vrot.slane %v198, 4
    %v200 = vmax.f32 %v198, %v199
    %v201 = vrot.slane %v200, 2
    %v202 = vmax.f32 %v200, %v201
    %v203 = vrot.slane %v202, 1
    %v204 = vmax.f32 %v202, %v203
    %v205 = vsub.f32 %v196, %v204
    %v206 = vmul.f32 %v205, 1.442695
    %v207 = vpow.pop %v206
    %v208 = vsel %vm197, %v207, 0.0
    %v209 = vrot.slane %v208, 4
    %v210 = vadd.f32 %v208, %v209
    %v211 = vrot.slane %v210, 2
    %v212 = vadd.f32 %v210, %v211
    %v213 = vrot.slane %v212, 1
    %v214 = vadd.f32 %v212, %v213
    %v215 = vlog2.pop %v214
    %v216 = vmul.f32 %v215, 0.6931472
    %v217 = vadd.f32 %v204, %v216
    %v218 = vlaneseq
    %v219 = vshrl.u32 %v218, 7
    %v220 = vlaneseq
    %v221 = vshrl.u32 %v220, 7
    %v222 = vsub.s32 0, %v221
    %v223 = vrot.slane %v34, %v222
    %vm224 = vcmp.eq.s32.totalorder %v219, %v223
    %v225 = vsel %vm224, %v196, 0.0
    %v226 = vsel %vm197, %v225, 0.0
    %v227 = vrot.slane %v226, 4
    %v228 = vadd.f32 %v226, %v227
    %v229 = vrot.slane %v228, 2
    %v230 = vadd.f32 %v228, %v229
    %v231 = vrot.slane %v230, 1
    %v232 = vadd.f32 %v230, %v231
    %v233 = vsub.f32 %v217, %v232
    %vm234 = vcmask 57344
    %v235 = vsel %vm234, %v233, 0.0
    %236 = vadd.xlane.f32.xlu0 %v235
    %v237 = vpop.xlane.xlu0 %236
    %v238 = vrot.slane %v237, 4
    %v239 = vadd.f32 %v237, %v238
    %v240 = vrot.slane %v239, 2
    %v241 = vadd.f32 %v239, %v240
    %v242 = vrot.slane %v241, 1
    %v243 = vadd.f32 %v241, %v242
    %s244 = vtos %v243
    %s245 = smul.f32 %s244, 0.125
    %s246 = scalar_lea.smem [#allocation2], 0
    %247 = sst [smem:[%s246]] %s245
    %vm248 = vcmp.eq.f32.partialorder %v196, %v204
    %v249 = vsel %vm248, %v219, 2
    %v250 = vsel %vm197, %v249, 2147483647
    %v251 = vrot.slane %v250, 4
    %vm252 = vcmp.lt.s32.totalorder %v250, %v251
    %v253 = vsel %vm252, %v250, %v251
    %v254 = vrot.slane %v253, 2
    %vm255 = vcmp.lt.s32.totalorder %v253, %v254
    %v256 = vsel %vm255, %v253, %v254
    %v257 = vrot.slane %v256, 1
    %vm258 = vcmp.lt.s32.totalorder %v256, %v257
    %v259 = vsel %vm258, %v256, %v257
    %260 = vst.msk [vmem:[#allocation5] sm:$0x1] %vm234, %v259
    // Predicated region
    $region26: #{training_net_forward.1} parent=1 // pred_check
      _
    $region27: #{training_net_forward.1} parent=1 // pred_check_branch
      %262 = sbr.rel (0) target = $region29
    $region28: #{training_net_forward.1} parent=1 // pred_region
      %s264 = ssub.s32 16, 16
      %265 = vsyncadd [#allocation4], %s264
      %268 = dma.smem_to_hbm [#allocation2], 16, %s6, [#allocation4]
    $region29: #{training_net_forward.1} parent=1 // pred_fallthru
      _
    // Predicated region
    $region30: #{training_net_forward.1} parent=1 // pred_check
      _
    $region31: #{training_net_forward.1} parent=1 // pred_check_branch
      %270 = sbr.rel (0) target = $region33
    $region32: #{training_net_forward.1} parent=1 // pred_region
      %s272 = ssub.s32 16, 16
      %273 = vsyncadd [#allocation3], %s272
      %s275 = sshll.u32 [#allocation5], 4
      %s276 = int_to_ptr.vmem [resolvable:$true] %s275
      %278 = dma.vmem_to_hbm [thread:$0]  %s276, 16, %s7, [#allocation3]
    $region33: #{training_net_forward.1} parent=1 // pred_fallthru
      _
    // Predicated region
    $region34: #{training_net_forward.1} parent=1 // pred_check
      _
    $region35: #{training_net_forward.1} parent=1 // pred_check_branch
      %280 = sbr.rel (0) target = $region37
    $region36: #{training_net_forward.1} parent=1 // pred_region
      %281 = dma.done [#allocation4], 16
    $region37: #{training_net_forward.1} parent=1 // pred_fallthru
      _
    // Predicated region
    $region38: #{training_net_forward.1} parent=1 // pred_check
      _
    $region39: #{training_net_forward.1} parent=1 // pred_check_branch
      %283 = sbr.rel (0) target = $region41
    $region40: #{training_net_forward.1} parent=1 // pred_region
      %284 = dma.done [#allocation3], 16
    $region41: #{training_net_forward.1} parent=1 // pred_fallthru
      _
    %285 = sfence
    %286 = vsyncpa [#allocation3], 1
    %287 = vsyncpa [#allocation4], 1

</llo_original>
